<compile_context>
chip_gen: v7x
topology: tpu7x:2x2x1
jax: 0.10.0
libtpu: 0.0.40
codegen_flags: <defaults>
</compile_context>

<pallas_src>
import functools

import jax
import jax.numpy as jnp
from jax.experimental import pallas as pl
from jax.experimental.pallas import tpu as pltpu

STATE_SIZE = 4      # CartPole-v1 observation dim
ACTION_SIZE = 2     # CartPole-v1 action dim
HIDDEN = 24
LANE = 128


def _round_up(n, m):
    return ((n + m - 1) // m) * m


def _chip_config():
    """Returns (batch-tile cap, vmem_limit_bytes, bf16_relu, two_tensorcores)."""
    try:
        kind = jax.devices()[0].device_kind.lower()
    except Exception:
        kind = ""
    if "v7" in kind:
        # v7x: 64 MiB physical VMEM (32 MiB scoped), 2 TensorCores, bf16 VPU.
        return 65536, 32 * 1024 * 1024, True, True
    if "v6" in kind:
        # v6e: 128 MiB VMEM, single TC, bf16 VPU.
        return 131072, 64 * 1024 * 1024, True, False
    if "v5" in kind:
        # v5e: 128 MiB VMEM, single TC, NO bf16 VALU -> keep elementwise in f32.
        return 131072, 64 * 1024 * 1024, False, False
    # Unknown / interpret mode: conservative defaults.
    return 32768, 32 * 1024 * 1024, True, False


def _choose_tile(B, tb, cap, two_cores):
    """Pick batch tile TB (multiple of 128) and padded batch Bp (multiple of TB)."""
    full = _round_up(B, LANE)
    if tb is not None:
        TB = max(LANE, min(_round_up(tb, LANE), full))
    elif full <= cap:
        if two_cores and B >= 16384:
            # Split into (at least) 2 tiles so both v7x TensorCores get work.
            TB = _round_up(pl.cdiv(full, 2), LANE)
        else:
            TB = full
    else:
        n = pl.cdiv(full, cap)
        if two_cores and n % 2:
            n += 1                      # even tile count for the 2 TCs
        TB = _round_up(pl.cdiv(B, n), LANE)
    Bp = _round_up(B, TB)
    return TB, Bp


# --------------------------------------------------------------------------- #
# Kernels (batch on the lane axis: x [4, TB], activations [24, TB], q [2, TB])
# --------------------------------------------------------------------------- #
def _mlp_trunk(x_ref, w1_ref, b1_ref, w2_ref, b2_ref, w3_ref, b3_ref, *, bf16_relu):
    def relu_narrow(h):
        if bf16_relu:
            # Narrow before the max so the [24, TB] f32 temporary dies early
            # (bf16 VPU available on v6e/v7x); relu(cast(x)) == cast(relu(x)).
            return jnp.maximum(h.astype(jnp.bfloat16), jnp.bfloat16(0.0))
        # v5e: no bf16 VALU -> keep the max in f32, then narrow for the MXU.
        return jnp.maximum(h, 0.0).astype(jnp.bfloat16)

    xT = x_ref[...].astype(jnp.bfloat16)                                # [4, TB]
    h1 = jnp.dot(w1_ref[...], xT,
                 preferred_element_type=jnp.float32) + b1_ref[...]      # [24, TB] f32
    h1 = relu_narrow(h1)                                                # [24, TB] bf16
    h2 = jnp.dot(w2_ref[...], h1,
                 preferred_element_type=jnp.float32) + b2_ref[...]      # [24, TB] f32
    h2 = relu_narrow(h2)                                                # [24, TB] bf16
    return jnp.dot(w3_ref[...], h2,
                   preferred_element_type=jnp.float32) + b3_ref[...]    # [2, TB] f32


def dqn_q_kernel(x_ref, w1_ref, b1_ref, w2_ref, b2_ref, w3_ref, b3_ref,
                 o_ref, *, bf16_relu):
    q = _mlp_trunk(x_ref, w1_ref, b1_ref, w2_ref, b2_ref, w3_ref, b3_ref,
                   bf16_relu=bf16_relu)
    o_ref[...] = q.astype(o_ref.dtype)                                  # bf16 store


def dqn_action_kernel(x_ref, w1_ref, b1_ref, w2_ref, b2_ref, w3_ref, b3_ref,
                      a_ref, *, bf16_relu):
    q = _mlp_trunk(x_ref, w1_ref, b1_ref, w2_ref, b2_ref, w3_ref, b3_ref,
                   bf16_relu=bf16_relu)                                  # [2, TB] f32
    # Fused greedy action selection (argmax over the 2 Q-values).
    a_ref[...] = (q[1:2, :] > q[0:1, :]).astype(jnp.int32)              # [1, TB] i32


# --------------------------------------------------------------------------- #
# pallas_call plumbing
# --------------------------------------------------------------------------- #
def _pallas_dqn(kernel_body, out_rows, out_dtype, xT, params, TB, Bp, vmem,
                bf16_relu):
    const = lambda i: (0, 0)     # weights/biases: VMEM-resident, no re-DMA
    in_specs = [
        pl.BlockSpec((STATE_SIZE, TB), lambda i: (0, i)),
        pl.BlockSpec((HIDDEN, STATE_SIZE), const),
        pl.BlockSpec((HIDDEN, 1), const),
        pl.BlockSpec((HIDDEN, HIDDEN), const),
        pl.BlockSpec((HIDDEN, 1), const),
        pl.BlockSpec((ACTION_SIZE, HIDDEN), const),
        pl.BlockSpec((ACTION_SIZE, 1), const),
    ]
    out_spec = pl.BlockSpec((out_rows, TB), lambda i: (0, i))
    return pl.pallas_call(
        functools.partial(kernel_body, bf16_relu=bf16_relu),
        out_shape=jax.ShapeDtypeStruct((out_rows, Bp), out_dtype),
        grid=(Bp // TB,),
        in_specs=in_specs,
        out_specs=out_spec,
        compiler_params=pltpu.CompilerParams(
            dimension_semantics=("parallel",),
            vmem_limit_bytes=vmem,
        ),
    )(xT, params["w1"], params["b1"], params["w2"], params["b2"],
      params["w3"], params["b3"])


def dqn_forward(x, params, *, tb=None):
    """x: [B, STATE_SIZE] f32. Returns Q-values [B, ACTION_SIZE] f32."""
    B = x.shape[0]
    cap, vmem, bf16_relu, two_cores = _chip_config()
    TB, Bp = _choose_tile(B, tb, cap, two_cores)
    xT = jnp.pad(x, ((0, Bp - B), (0, 0))).T            # [4, Bp] f32 (cast in-kernel)
    qT = _pallas_dqn(dqn_q_kernel, ACTION_SIZE, jnp.bfloat16,
                     xT, params, TB, Bp, vmem, bf16_relu)
    return qT[:, :B].T.astype(jnp.float32)              # [B, 2]


def dqn_select_actions(x, params, *, tb=None):
    """Greedy-action path with argmax fused into the kernel. Returns int32 [B]."""
    B = x.shape[0]
    cap, vmem, bf16_relu, two_cores = _chip_config()
    TB, Bp = _choose_tile(B, tb, cap, two_cores)
    xT = jnp.pad(x, ((0, Bp - B), (0, 0))).T
    aT = _pallas_dqn(dqn_action_kernel, 1, jnp.int32,
                     xT, params, TB, Bp, vmem, bf16_relu)
    return aT[0, :B]


# --------------------------------------------------------------------------- #
# Params + pure-JAX reference
# --------------------------------------------------------------------------- #
def init_params(key):
    """PyTorch nn.Linear default init (uniform +/- 1/sqrt(fan_in)).
    Weights stored [out_features, in_features] in bf16; biases [out, 1] f32."""
    def linear(key, fan_in, fan_out):
        kw, kb = jax.random.split(key)
        bound = 1.0 / jnp.sqrt(fan_in)
        w = jax.random.uniform(kw, (fan_out, fan_in), jnp.float32, -bound, bound)
        b = jax.random.uniform(kb, (fan_out, 1), jnp.float32, -bound, bound)
        return w.astype(jnp.bfloat16), b

    k1, k2, k3 = jax.random.split(key, 3)
    w1, b1 = linear(k1, STATE_SIZE, HIDDEN)
    w2, b2 = linear(k2, HIDDEN, HIDDEN)
    w3, b3 = linear(k3, HIDDEN, ACTION_SIZE)
    return dict(w1=w1, b1=b1, w2=w2, b2=b2, w3=w3, b3=b3)


def reference_forward(x, params):
    """Pure-JAX reference mirroring the kernel numerics (bf16 dots, f32 acc)."""
    xb = x.astype(jnp.bfloat16)
    h1 = jnp.dot(xb, params["w1"].T,
                 preferred_element_type=jnp.float32) + params["b1"].T
    h1 = jnp.maximum(h1, 0.0).astype(jnp.bfloat16)
    h2 = jnp.dot(h1, params["w2"].T,
                 preferred_element_type=jnp.float32) + params["b2"].T
    h2 = jnp.maximum(h2, 0.0).astype(jnp.bfloat16)
    return jnp.dot(h2, params["w3"].T,
                   preferred_element_type=jnp.float32) + params["b3"].T


if __name__ == "__main__":
    key = jax.random.PRNGKey(0)
    kx, kp = jax.random.split(key)

    B = 8
    x = jax.random.normal(kx, (B, STATE_SIZE), jnp.float32)
    params = init_params(kp)

    q = jax.block_until_ready(dqn_forward(x, params))
    ref = reference_forward(x, params)

    assert q.shape == (B, ACTION_SIZE), q.shape
    # Kernel stores Q-values as bf16 -> compare at bf16-level tolerance.
    assert jnp.allclose(q, ref, atol=3e-2, rtol=3e-2), "Q-value mismatch vs reference"

    actions = jax.block_until_ready(dqn_select_actions(x, params))
    assert actions.shape == (B,) and actions.dtype == jnp.int32
    ref_actions = jnp.argmax(ref, axis=-1).astype(jnp.int32)
    gap = jnp.abs(ref[:, 1] - ref[:, 0])
    # Only require agreement where the reference Q-gap is not a near-tie.
    assert bool(jnp.all(jnp.where(gap > 1e-3, actions == ref_actions, True))), \
        "action mismatch vs reference argmax"

    print("KERNEL_OK")
</pallas_src>

<mosaic_0001>
module attributes {stable_mosaic.version = 11 : i64} {
  func.func @dqn_q_kernel(%arg0: i32, %arg1: memref<4x128xf32, #tpu.memory_space<vmem>>, %arg2: memref<24x4xbf16, #tpu.memory_space<vmem>>, %arg3: memref<24x1xf32, #tpu.memory_space<vmem>>, %arg4: memref<24x24xbf16, #tpu.memory_space<vmem>>, %arg5: memref<24x1xf32, #tpu.memory_space<vmem>>, %arg6: memref<2x24xbf16, #tpu.memory_space<vmem>>, %arg7: memref<2x1xf32, #tpu.memory_space<vmem>>, %arg8: memref<2x128xbf16, #tpu.memory_space<vmem>>) attributes {dimension_semantics = [#tpu.dimension_semantics<parallel>], iteration_bounds = array<i64: 1>, scalar_prefetch = 0 : i64, scratch_operands = 0 : i64, tpu.core_type = #tpu.core_type<tc>, window_params = [{transform_indices = @transform_0, window_bounds = array<i64: 4, 128>}, {pipeline_mode = #tpu.pipeline_mode<synchronous>, transform_indices = @transform_1, window_bounds = array<i64: 24, 4>}, {pipeline_mode = #tpu.pipeline_mode<synchronous>, transform_indices = @transform_2, window_bounds = array<i64: 24, 1>}, {pipeline_mode = #tpu.pipeline_mode<synchronous>, transform_indices = @transform_3, window_bounds = array<i64: 24, 24>}, {pipeline_mode = #tpu.pipeline_mode<synchronous>, transform_indices = @transform_4, window_bounds = array<i64: 24, 1>}, {pipeline_mode = #tpu.pipeline_mode<synchronous>, transform_indices = @transform_5, window_bounds = array<i64: 2, 24>}, {pipeline_mode = #tpu.pipeline_mode<synchronous>, transform_indices = @transform_6, window_bounds = array<i64: 2, 1>}, {transform_indices = @transform_7, window_bounds = array<i64: 2, 128>}]} {
    %c0 = arith.constant 0 : index
    %c0_0 = arith.constant 0 : index
    %0 = vector.load %arg1[%c0, %c0_0] : memref<4x128xf32, #tpu.memory_space<vmem>>, vector<4x128xf32>
    %1 = arith.truncf %0 : vector<4x128xf32> to vector<4x128xbf16>
    %c0_1 = arith.constant 0 : index
    %c0_2 = arith.constant 0 : index
    %2 = vector.load %arg2[%c0_1, %c0_2] : memref<24x4xbf16, #tpu.memory_space<vmem>>, vector<24x4xbf16>
    %cst = arith.constant dense<0.000000e+00> : vector<24x128xf32>
    %3 = tpu.matmul %2, %1, %cst {dimension_numbers = #tpu.dot_dimension_numbers<[1], [0], [0], [1], [0, 0, 1, 1], [], []>} : vector<24x4xbf16>, vector<4x128xbf16>, vector<24x128xf32> -> vector<24x128xf32>
    %c0_3 = arith.constant 0 : index
    %c0_4 = arith.constant 0 : index
    %4 = vector.load %arg3[%c0_3, %c0_4] : memref<24x1xf32, #tpu.memory_space<vmem>>, vector<24x1xf32>
    %5 = vector.broadcast %4 : vector<24x1xf32> to vector<24x128xf32>
    %6 = arith.addf %3, %5 : vector<24x128xf32>
    %7 = arith.truncf %6 : vector<24x128xf32> to vector<24x128xbf16>
    %cst_5 = arith.constant 0.000000e+00 : bf16
    %8 = vector.broadcast %cst_5 : bf16 to vector<24x128xbf16>
    %9 = arith.maximumf %7, %8 : vector<24x128xbf16>
    %c0_6 = arith.constant 0 : index
    %c0_7 = arith.constant 0 : index
    %10 = vector.load %arg4[%c0_6, %c0_7] : memref<24x24xbf16, #tpu.memory_space<vmem>>, vector<24x24xbf16>
    %cst_8 = arith.constant dense<0.000000e+00> : vector<24x128xf32>
    %11 = tpu.matmul %10, %9, %cst_8 {dimension_numbers = #tpu.dot_dimension_numbers<[1], [0], [0], [1], [0, 0, 1, 1], [], []>} : vector<24x24xbf16>, vector<24x128xbf16>, vector<24x128xf32> -> vector<24x128xf32>
    %c0_9 = arith.constant 0 : index
    %c0_10 = arith.constant 0 : index
    %12 = vector.load %arg5[%c0_9, %c0_10] : memref<24x1xf32, #tpu.memory_space<vmem>>, vector<24x1xf32>
    %13 = vector.broadcast %12 : vector<24x1xf32> to vector<24x128xf32>
    %14 = arith.addf %11, %13 : vector<24x128xf32>
    %15 = arith.truncf %14 : vector<24x128xf32> to vector<24x128xbf16>
    %cst_11 = arith.constant 0.000000e+00 : bf16
    %16 = vector.broadcast %cst_11 : bf16 to vector<24x128xbf16>
    %17 = arith.maximumf %15, %16 : vector<24x128xbf16>
    %c0_12 = arith.constant 0 : index
    %c0_13 = arith.constant 0 : index
    %18 = vector.load %arg6[%c0_12, %c0_13] : memref<2x24xbf16, #tpu.memory_space<vmem>>, vector<2x24xbf16>
    %cst_14 = arith.constant dense<0.000000e+00> : vector<2x128xf32>
    %19 = tpu.matmul %18, %17, %cst_14 {dimension_numbers = #tpu.dot_dimension_numbers<[1], [0], [0], [1], [0, 0, 1, 1], [], []>} : vector<2x24xbf16>, vector<24x128xbf16>, vector<2x128xf32> -> vector<2x128xf32>
    %c0_15 = arith.constant 0 : index
    %c0_16 = arith.constant 0 : index
    %20 = vector.load %arg7[%c0_15, %c0_16] : memref<2x1xf32, #tpu.memory_space<vmem>>, vector<2x1xf32>
    %21 = vector.broadcast %20 : vector<2x1xf32> to vector<2x128xf32>
    %22 = arith.addf %19, %21 : vector<2x128xf32>
    %23 = arith.truncf %22 : vector<2x128xf32> to vector<2x128xbf16>
    %c0_17 = arith.constant 0 : index
    %c0_18 = arith.constant 0 : index
    %24 = vector.load %arg8[%c0_17, %c0_18] : memref<2x128xbf16, #tpu.memory_space<vmem>>, vector<2x128xbf16>
    tpu.vector_store %arg8[%c0_17, %c0_18], %23 {strides = array<i32>} : memref<2x128xbf16, #tpu.memory_space<vmem>>, vector<2x128xbf16>,
    return
  }
  func.func @transform_0(%arg0: i32) -> (i32, i32) {
    %c0_i32 = arith.constant 0 : i32
    %c0_i32_0 = arith.constant 0 : i32
    return %c0_i32, %arg0 : i32, i32
  }
  func.func @transform_1(%arg0: i32) -> (i32, i32) {
    %c0_i32 = arith.constant 0 : i32
    %c0_i32_0 = arith.constant 0 : i32
    %c0_i32_1 = arith.constant 0 : i32
    return %c0_i32, %c0_i32_0 : i32, i32
  }
  func.func @transform_2(%arg0: i32) -> (i32, i32) {
    %c0_i32 = arith.constant 0 : i32
    %c0_i32_0 = arith.constant 0 : i32
    %c0_i32_1 = arith.constant 0 : i32
    return %c0_i32, %c0_i32_0 : i32, i32
  }
  func.func @transform_3(%arg0: i32) -> (i32, i32) {
    %c0_i32 = arith.constant 0 : i32
    %c0_i32_0 = arith.constant 0 : i32
    %c0_i32_1 = arith.constant 0 : i32
    return %c0_i32, %c0_i32_0 : i32, i32
  }
  func.func @transform_4(%arg0: i32) -> (i32, i32) {
    %c0_i32 = arith.constant 0 : i32
    %c0_i32_0 = arith.constant 0 : i32
    %c0_i32_1 = arith.constant 0 : i32
    return %c0_i32, %c0_i32_0 : i32, i32
  }
  func.func @transform_5(%arg0: i32) -> (i32, i32) {
    %c0_i32 = arith.constant 0 : i32
    %c0_i32_0 = arith.constant 0 : i32
    %c0_i32_1 = arith.constant 0 : i32
    return %c0_i32, %c0_i32_0 : i32, i32
  }
  func.func @transform_6(%arg0: i32) -> (i32, i32) {
    %c0_i32 = arith.constant 0 : i32
    %c0_i32_0 = arith.constant 0 : i32
    %c0_i32_1 = arith.constant 0 : i32
    return %c0_i32, %c0_i32_0 : i32, i32
  }
  func.func @transform_7(%arg0: i32) -> (i32, i32) {
    %c0_i32 = arith.constant 0 : i32
    %c0_i32_0 = arith.constant 0 : i32
    return %c0_i32, %arg0 : i32, i32
  }
}

</mosaic_0001>

<llo_original>
// kernel: tpu_custom_call.1
$region0: #{tpu_custom_call.1}
  #allocation0 [shape = 'u32[]', space=smem, size = 0x4, offset = 0x4, fixed_abs, tag = 'smem constant byte address 0x4 - core index']
  #allocation1 [shape = 'u32[144,128]{1,0:T(1,128)}', space=vmem, size = 0x12000, scoped, tag = 'internal scratch']
  %s0 = inlined_call_operand.vmem [shape: f32[4,128], index: 0, kind: input, shape index: {}]
  %s1 = inlined_call_operand.vmem [shape: bf16[24,4], index: 1, kind: input, shape index: {}]
  %s2 = inlined_call_operand.vmem [shape: f32[24,1], index: 2, kind: input, shape index: {}]
  %s3 = inlined_call_operand.vmem [shape: bf16[24,24], index: 3, kind: input, shape index: {}]
  %s4 = inlined_call_operand.vmem [shape: f32[24,1], index: 4, kind: input, shape index: {}]
  %s5 = inlined_call_operand.vmem [shape: bf16[2,24], index: 5, kind: input, shape index: {}]
  %s6 = inlined_call_operand.vmem [shape: f32[2,1], index: 6, kind: input, shape index: {}]
  %s7 = inlined_call_operand.hbm [shape: bf16[2,128], index: 7, kind: output, shape index: {}]
  %s8 = sld [smem:[#allocation0]]
  $region38: #{tpu_custom_call.1} parent=0
    _
  %s10 = ssub.s32 1, %s8
  %s11 = scalar_select 0, %s10, %s8
  $region1: #{tpu_custom_call.1} parent=0
    #allocation2 [shape = 'u8[512]{0}', space=vmem, size = 0x400, scoped, tag = 'output window, operand 0, single buffered']
    #allocation3 [shape = 's32[1]{0}', space=sflag, size = 0x4, scoped, tag = 'scoped memory for tpu_custom_call.1']
    %12 = vsyncpa [#allocation3], 0
    // Predicated region
    $region2: #{tpu_custom_call.1} parent=1 // pred_check
      _
    $region3: #{tpu_custom_call.1} parent=1 // pred_check_branch
      %14 = sbr.rel (0) target = $region5
    $region4: #{tpu_custom_call.1} parent=1 // pred_region
      _
    $region5: #{tpu_custom_call.1} parent=1 // pred_fallthru
      _
    // Predicated region
    $region6: #{tpu_custom_call.1} parent=1 // pred_check
      _
    $region7: #{tpu_custom_call.1} parent=1 // pred_check_branch
      %16 = sbr.rel (0) target = $region9
    $region8: #{tpu_custom_call.1} parent=1 // pred_region
      _
    $region9: #{tpu_custom_call.1} parent=1 // pred_fallthru
      _
    // Predicated region
    $region10: #{tpu_custom_call.1} parent=1 // pred_check
      _
    $region11: #{tpu_custom_call.1} parent=1 // pred_check_branch
      %18 = sbr.rel (0) target = $region13
    $region12: #{tpu_custom_call.1} parent=1 // pred_region
      _
    $region13: #{tpu_custom_call.1} parent=1 // pred_fallthru
      _
    // Predicated region
    $region14: #{tpu_custom_call.1} parent=1 // pred_check
      _
    $region15: #{tpu_custom_call.1} parent=1 // pred_check_branch
      %20 = sbr.rel (0) target = $region17
    $region16: #{tpu_custom_call.1} parent=1 // pred_region
      _
    $region17: #{tpu_custom_call.1} parent=1 // pred_fallthru
      _
    // Predicated region
    $region18: #{tpu_custom_call.1} parent=1 // pred_check
      _
    $region19: #{tpu_custom_call.1} parent=1 // pred_check_branch
      %22 = sbr.rel (0) target = $region21
    $region20: #{tpu_custom_call.1} parent=1 // pred_region
      _
    $region21: #{tpu_custom_call.1} parent=1 // pred_fallthru
      _
    // Predicated region
    $region22: #{tpu_custom_call.1} parent=1 // pred_check
      _
    $region23: #{tpu_custom_call.1} parent=1 // pred_check_branch
      %24 = sbr.rel (0) target = $region25
    $region24: #{tpu_custom_call.1} parent=1 // pred_region
      _
    $region25: #{tpu_custom_call.1} parent=1 // pred_fallthru
      _
    // Predicated region
    $region26: #{tpu_custom_call.1} parent=1 // pred_check
      _
    $region27: #{tpu_custom_call.1} parent=1 // pred_check_branch
      %26 = sbr.rel (0) target = $region29
    $region28: #{tpu_custom_call.1} parent=1 // pred_region
      _
    $region29: #{tpu_custom_call.1} parent=1 // pred_fallthru
      _
    %v28 = vld [vmem:[%s0] sm:$0xf]
    %v29 = vpack.c.bf16 %v28, %v28
    %v30 = vld [vmem:[%s1] sm:$0xf]
    %v31 = vld [vmem:[%s1 + $0x4] sm:$0xf]
    %v32 = vld [vmem:[%s1 + $0x8] sm:$0xf]
    %v33 = vld [vmem:[%s2] sm:$0xff]
    %v34 = vld [vmem:[%s2 + $0x8] sm:$0xff]
    %v35 = vld [vmem:[%s2 + $0x10] sm:$0xff]
    %37 = vset.pattern.permute.xlu0 0
    %38 = vperm.xlu0 %37, %v33
    %v39 = vpop.permute.xlu0 %38
    %42 = vset.pattern.permute.xlu0 0
    %43 = vperm.xlu0 %42, %v34
    %v44 = vpop.permute.xlu0 %43
    %47 = vset.pattern.permute.xlu0 0
    %48 = vperm.xlu0 %47, %v35
    %v49 = vpop.permute.xlu0 %48
    %v54 = vunpack.c.l.b16 %v30
    %v55 = vunpack.c.l.b16 %v31
    %v56 = vunpack.c.l.b16 %v32
    %v57 = vpack.c.b16 %v55, %v54
    %v58 = vpack.c.b16 %v56, %v56
    %vm59 = vcmask 31744
    %v61 = vsel %vm59, %v57, 0
    %v64 = vsel %vm59, %v58, 0
    %vm66 = vcmask 1041408
    %v68 = vsel %vm66, %v29, 0
    %70 = vmatprep.subr.bf16.mxu0 0
    %71 = vmatpush1.bf16.msra.mxu0 %v68
    %72 = vmatprep.subr.bf16.mxu0 0
    %73 = vmatpush1.bf16.msra.mxu0 0
    %74 = vmatprep.subr.bf16.mxu0 0
    %75 = vmatpush1.bf16.msra.mxu0 0
    %76 = vmatprep.subr.bf16.mxu0 0
    %77 = vmatpush1.bf16.msra.mxu0 0
    %78 = vmatprep.subr.bf16.mxu0 0
    %79 = vmatpush1.bf16.msra.mxu0 0
    %80 = vmatprep.subr.bf16.mxu0 0
    %81 = vmatpush1.bf16.msra.mxu0 0
    %82 = vmatprep.subr.bf16.mxu0 0
    %83 = vmatpush1.bf16.msra.mxu0 0
    %84 = vmatprep.subr.bf16.mxu0 0
    %85 = vmatpush1.bf16.msra.mxu0 0
    %86 = vmatprep.subr.bf16.mxu0 0
    %87 = vmatpush1.bf16.msra.mxu0 0
    %88 = vmatprep.subr.bf16.mxu0 0
    %89 = vmatpush1.bf16.msra.mxu0 0
    %90 = vmatprep.subr.bf16.mxu0 0
    %91 = vmatpush1.bf16.msra.mxu0 0
    %92 = vmatprep.subr.bf16.mxu0 0
    %93 = vmatpush1.bf16.msra.mxu0 0
    %94 = vmatprep.subr.bf16.mxu0 0
    %95 = vmatpush1.bf16.msra.mxu0 0
    %96 = vmatprep.subr.bf16.mxu0 0
    %97 = vmatpush1.bf16.msra.mxu0 0
    %98 = vmatprep.subr.bf16.mxu0 0
    %99 = vmatpush1.bf16.msra.mxu0 0
    %100 = vmatprep.subr.bf16.mxu0 0
    %101 = vmatpush1.bf16.msra.mxu0 0
    %102 = vmatprep.mubr.bf16.mxu0 0
    %103 = vmatmul.mubr.bf16.gmra.mrb[0].mxu0 %v61
    %v104 = vpop.f32.mrb[0].mxu0
    %v105 = vadd.f32 %v39, %v104
    %v106 = vpop.f32.mrb[0].mxu0
    %v107 = vpop.f32.mrb[0].mxu0
    %v108 = vadd.f32 %v44, %v107
    %v109 = vpop.f32.mrb[0].mxu0
    %110 = vmatprep.mubr.bf16.mxu0 0
    %111 = vmatmul.mubr.bf16.gmra.mrb[0].mxu0 %v64
    %v112 = vpop.f32.mrb[0].mxu0
    %v113 = vadd.f32 %v49, %v112
    %v114 = vpop.f32.mrb[0].mxu0
    %v115 = vpop.f32.mrb[0].mxu0
    %v116 = vpop.f32.mrb[0].mxu0
    %117 = vdwg.mxu0
    %v118 = vpack.c.bf16 %v108, %v105
    %v119 = vpack.c.bf16 %v113, %v113
    %v120 = vmax.bf16 %v118, 0
    %v121 = vmax.bf16 %v119, 0
    %v122 = vld [vmem:[%s3] sm:$0xf]
    %v123 = vld [vmem:[%s3 + $0x4] sm:$0xf]
    %v124 = vld [vmem:[%s3 + $0x8] sm:$0xf]
    %v125 = vld [vmem:[%s4] sm:$0xff]
    %v126 = vld [vmem:[%s4 + $0x8] sm:$0xff]
    %v127 = vld [vmem:[%s4 + $0x10] sm:$0xff]
    %129 = vset.pattern.permute.xlu0 0
    %130 = vperm.xlu0 %129, %v125
    %v131 = vpop.permute.xlu0 %130
    %134 = vset.pattern.permute.xlu0 0
    %135 = vperm.xlu0 %134, %v126
    %v136 = vpop.permute.xlu0 %135
    %139 = vset.pattern.permute.xlu0 0
    %140 = vperm.xlu0 %139, %v127
    %v141 = vpop.permute.xlu0 %140
    %v146 = vunpack.c.l.b16 %v122
    %v147 = vunpack.c.l.b16 %v123
    %v148 = vunpack.c.l.b16 %v124
    %v149 = vpack.c.b16 %v147, %v146
    %v150 = vpack.c.b16 %v148, %v148
    %vm151 = vcmask 195584
    %v153 = vsel %vm151, %v149, 0
    %v156 = vsel %vm151, %v150, 0
    %vm158 = vcmask 1043456
    %v160 = vsel %vm158, %v121, 0
    %162 = vmatprep.subr.bf16.mxu0 0
    %163 = vmatpush1.bf16.msra.mxu0 %v120
    %164 = vmatprep.subr.bf16.mxu0 0
    %165 = vmatpush1.bf16.msra.mxu0 %v160
    %166 = vmatprep.subr.bf16.mxu0 0
    %167 = vmatpush1.bf16.msra.mxu0 0
    %168 = vmatprep.subr.bf16.mxu0 0
    %169 = vmatpush1.bf16.msra.mxu0 0
    %170 = vmatprep.subr.bf16.mxu0 0
    %171 = vmatpush1.bf16.msra.mxu0 0
    %172 = vmatprep.subr.bf16.mxu0 0
    %173 = vmatpush1.bf16.msra.mxu0 0
    %174 = vmatprep.subr.bf16.mxu0 0
    %175 = vmatpush1.bf16.msra.mxu0 0
    %176 = vmatprep.subr.bf16.mxu0 0
    %177 = vmatpush1.bf16.msra.mxu0 0
    %178 = vmatprep.subr.bf16.mxu0 0
    %179 = vmatpush1.bf16.msra.mxu0 0
    %180 = vmatprep.subr.bf16.mxu0 0
    %181 = vmatpush1.bf16.msra.mxu0 0
    %182 = vmatprep.subr.bf16.mxu0 0
    %183 = vmatpush1.bf16.msra.mxu0 0
    %184 = vmatprep.subr.bf16.mxu0 0
    %185 = vmatpush1.bf16.msra.mxu0 0
    %186 = vmatprep.subr.bf16.mxu0 0
    %187 = vmatpush1.bf16.msra.mxu0 0
    %188 = vmatprep.subr.bf16.mxu0 0
    %189 = vmatpush1.bf16.msra.mxu0 0
    %190 = vmatprep.subr.bf16.mxu0 0
    %191 = vmatpush1.bf16.msra.mxu0 0
    %192 = vmatprep.subr.bf16.mxu0 0
    %193 = vmatpush1.bf16.msra.mxu0 0
    %194 = vmatprep.mubr.bf16.mxu0 0
    %195 = vmatmul.mubr.bf16.gmra.mrb[0].mxu0 %v153
    %v196 = vpop.f32.mrb[0].mxu0
    %v197 = vadd.f32 %v131, %v196
    %v198 = vpop.f32.mrb[0].mxu0
    %v199 = vpop.f32.mrb[0].mxu0
    %v200 = vadd.f32 %v136, %v199
    %v201 = vpop.f32.mrb[0].mxu0
    %202 = vmatprep.mubr.bf16.mxu0 0
    %203 = vmatmul.mubr.bf16.gmra.mrb[0].mxu0 %v156
    %v204 = vpop.f32.mrb[0].mxu0
    %v205 = vadd.f32 %v141, %v204
    %v206 = vpop.f32.mrb[0].mxu0
    %v207 = vpop.f32.mrb[0].mxu0
    %v208 = vpop.f32.mrb[0].mxu0
    %209 = vdwg.mxu0
    %v210 = vpack.c.bf16 %v200, %v197
    %v211 = vpack.c.bf16 %v205, %v205
    %v212 = vmax.bf16 %v210, 0
    %v213 = vmax.bf16 %v211, 0
    %v214 = vld [vmem:[%s5] sm:$0x1]
    %v215 = vld [vmem:[%s6] sm:$0x3]
    %217 = vset.pattern.permute.xlu0 0
    %218 = vperm.xlu0 %217, %v215
    %v219 = vpop.permute.xlu0 %218
    %v222 = vsel %vm151, %v214, 0
    %v225 = vsel %vm158, %v213, 0
    %227 = vmatprep.subr.bf16.mxu0 0
    %228 = vmatpush1.bf16.msra.mxu0 %v212
    %229 = vmatprep.subr.bf16.mxu0 0
    %230 = vmatpush1.bf16.msra.mxu0 %v225
    %231 = vmatprep.subr.bf16.mxu0 0
    %232 = vmatpush1.bf16.msra.mxu0 0
    %233 = vmatprep.subr.bf16.mxu0 0
    %234 = vmatpush1.bf16.msra.mxu0 0
    %235 = vmatprep.subr.bf16.mxu0 0
    %236 = vmatpush1.bf16.msra.mxu0 0
    %237 = vmatprep.subr.bf16.mxu0 0
    %238 = vmatpush1.bf16.msra.mxu0 0
    %239 = vmatprep.subr.bf16.mxu0 0
    %240 = vmatpush1.bf16.msra.mxu0 0
    %241 = vmatprep.subr.bf16.mxu0 0
    %242 = vmatpush1.bf16.msra.mxu0 0
    %243 = vmatprep.subr.bf16.mxu0 0
    %244 = vmatpush1.bf16.msra.mxu0 0
    %245 = vmatprep.subr.bf16.mxu0 0
    %246 = vmatpush1.bf16.msra.mxu0 0
    %247 = vmatprep.subr.bf16.mxu0 0
    %248 = vmatpush1.bf16.msra.mxu0 0
    %249 = vmatprep.subr.bf16.mxu0 0
    %250 = vmatpush1.bf16.msra.mxu0 0
    %251 = vmatprep.subr.bf16.mxu0 0
    %252 = vmatpush1.bf16.msra.mxu0 0
    %253 = vmatprep.subr.bf16.mxu0 0
    %254 = vmatpush1.bf16.msra.mxu0 0
    %255 = vmatprep.subr.bf16.mxu0 0
    %256 = vmatpush1.bf16.msra.mxu0 0
    %257 = vmatprep.subr.bf16.mxu0 0
    %258 = vmatpush1.bf16.msra.mxu0 0
    %259 = vmatprep.mubr.bf16.mxu0 0
    %260 = vmatmul.mubr.bf16.gmra.mrb[0].mxu0 %v222
    %v261 = vpop.f32.mrb[0].mxu0
    %v262 = vadd.f32 %v219, %v261
    %v263 = vpop.f32.mrb[0].mxu0
    %v264 = vpop.f32.mrb[0].mxu0
    %v265 = vpop.f32.mrb[0].mxu0
    %266 = vdwg.mxu0
    %v267 = vpack.c.bf16 %v262, %v262
    %268 = vst [vmem:[#allocation2] sm:$0x1] %v267
    // Predicated region
    $region30: #{tpu_custom_call.1} parent=1 // pred_check
      _
    $region31: #{tpu_custom_call.1} parent=1 // pred_check_branch
      %270 = sbr.rel (0) target = $region33
    $region32: #{tpu_custom_call.1} parent=1 // pred_region
      %s272 = ssub.s32 16, 16
      %273 = vsyncadd [#allocation3], %s272
      %s275 = sshll.u32 [#allocation2], 4
      %s276 = int_to_ptr.vmem [resolvable:$true] %s275
      %278 = dma.vmem_to_hbm [thread:$0]  %s276, 16, %s7, [#allocation3]
    $region33: #{tpu_custom_call.1} parent=1 // pred_fallthru
      _
    // Predicated region
    $region34: #{tpu_custom_call.1} parent=1 // pred_check
      _
    $region35: #{tpu_custom_call.1} parent=1 // pred_check_branch
      %280 = sbr.rel (0) target = $region37
    $region36: #{tpu_custom_call.1} parent=1 // pred_region
      %281 = dma.done [#allocation3], 16
    $region37: #{tpu_custom_call.1} parent=1 // pred_fallthru
      _
    %282 = vsyncpa [#allocation3], 1

</llo_original>
